<compile_context>
chip_gen: v7x
topology: tpu7x:2x2x1
jax: 0.10.0
libtpu: 0.0.40
codegen_flags: <defaults>
</compile_context>

<pallas_src>
import functools

import jax
import jax.numpy as jnp
from jax.experimental import pallas as pl
from jax.experimental.pallas import tpu as pltpu


# ---------------------------------------------------------------------------
# Kernel: transposed fused affine map  y^T = W^T @ x^T + b
# Batch is the lane (last) axis of every block -> lane-dense loads & stores.
# ---------------------------------------------------------------------------
def affine_t_kernel(x_ref, w_ref, b_ref, o_ref):
    # x_ref: (K, TB)  w_ref: (N, K)  b_ref: (N, 1)  o_ref: (N, TB)
    x = x_ref[...]
    w = w_ref[...]
    b = b_ref[...]
    k_dim = w.shape[1]
    # K (=4) broadcast FMAs on the VPU; K is static and tiny -> fully unrolled.
    acc = w[:, 0:1] * x[0:1, :]
    for k in range(1, k_dim):
        acc = acc + w[:, k:k + 1] * x[k:k + 1, :]
    o_ref[...] = (acc + b).astype(o_ref.dtype)


# ---------------------------------------------------------------------------
# One-time parameter preparation (fold 3 Linear layers into one affine map).
# PyTorch layout: weight (out, in), bias (out,).
# ---------------------------------------------------------------------------
def prepare_params(params):
    w1 = params["w1"].astype(jnp.float32)
    w2 = params["w2"].astype(jnp.float32)
    w3 = params["w3"].astype(jnp.float32)
    b1 = params["b1"].astype(jnp.float32)
    b2 = params["b2"].astype(jnp.float32)
    b3 = params["b3"].astype(jnp.float32)

    # y = ((x @ W1^T + b1) @ W2^T + b2) @ W3^T + b3
    #   = x @ (W1^T @ W2^T @ W3^T) + ((b1 @ W2^T + b2) @ W3^T + b3)
    w_combined = w1.T @ w2.T @ w3.T                 # (in_features, out_features)
    b_combined = (b1 @ w2.T + b2) @ w3.T + b3       # (out_features,)
    return w_combined, b_combined


# ---------------------------------------------------------------------------
# Forward wrapper: XLA fast path for tiny problems, lane-dense Pallas kernel
# (batch-tiled grid, resident weights) for the large-batch regime.
# ---------------------------------------------------------------------------
@functools.partial(jax.jit, static_argnames=("block_batch", "use_pallas"))
def blob_model_forward(x, w, b, *, block_batch=1024, use_pallas=None):
    B, K = x.shape
    N = w.shape[1]

    if use_pallas is None:
        # Launch/overhead-bound below ~1k rows with K,N < 128: let XLA's fused
        # dot handle it.  The Pallas kernel is for the large-batch regime.
        use_pallas = B > 1024

    if not use_pallas:
        return x @ w + b

    # Batch tile: full batch if small, otherwise a lane-aligned (multiple of
    # 128) tile near the mem-bound knee.  VMEM per step ~ 2*(K+N)*tb*4 bytes
    # (double-buffered x^T / y^T) + resident W^T/b -> a few hundred KiB at
    # tb=1024, far under every generation's budget (v7x's 64 MiB included).
    tb = B if B <= block_batch else max(128, (block_batch // 128) * 128)
    grid = (pl.cdiv(B, tb),)

    # Transposed problem: batch on lanes for both the activation stream and
    # the output (lane-dense loads + unmasked stores, no padding bytes).
    x_t = x.T                    # (K, B)
    w_t = w.T                    # (N, K)  resident across all batch tiles
    b_col = b.reshape(N, 1)      # (N, 1)  resident

    flops = 2 * B * K * N
    bytes_accessed = 4 * (B * K + N * K + N + B * N)

    out_t = pl.pallas_call(
        affine_t_kernel,
        out_shape=jax.ShapeDtypeStruct((N, B), jnp.float32),
        grid=grid,
        in_specs=[
            pl.BlockSpec((K, tb), lambda i: (0, i)),   # x^T: tiled over batch
            pl.BlockSpec((N, K), lambda i: (0, 0)),    # W^T: replicated/resident
            pl.BlockSpec((N, 1), lambda i: (0, 0)),    # b:   replicated/resident
        ],
        out_specs=pl.BlockSpec((N, tb), lambda i: (0, i)),
        compiler_params=pltpu.CompilerParams(
            # Shards batch tiles across both TensorCores on v7x when grid > 1;
            # measured no-op (but harmless) on single-TC v5e/v6e.
            dimension_semantics=("parallel",),
            vmem_limit_bytes=32 * 1024 * 1024,
        ),
        cost_estimate=pl.CostEstimate(
            flops=flops, transcendentals=0, bytes_accessed=bytes_accessed),
    )(x_t, w_t, b_col)
    return out_t.T


# ---------------------------------------------------------------------------
# Deterministic init mirroring nn.Linear (weight: (out, in), bias: (out,)).
# ---------------------------------------------------------------------------
def init_params(key, input_features, output_features, hidden_units=14):
    ks = jax.random.split(key, 6)

    def lin(kw, kb, fan_in, fan_out):
        bound = 1.0 / jnp.sqrt(fan_in)
        w = jax.random.uniform(kw, (fan_out, fan_in), jnp.float32, -bound, bound)
        b = jax.random.uniform(kb, (fan_out,), jnp.float32, -bound, bound)
        return w, b

    w1, b1 = lin(ks[0], ks[1], input_features, hidden_units)
    w2, b2 = lin(ks[2], ks[3], hidden_units, hidden_units)
    w3, b3 = lin(ks[4], ks[5], hidden_units, output_features)
    return {"w1": w1, "b1": b1, "w2": w2, "b2": b2, "w3": w3, "b3": b3}


if __name__ == "__main__":
    key = jax.random.PRNGKey(0)
    k_x, k_p = jax.random.split(key)

    batch = 8
    input_features = 4
    output_features = 3
    hidden_units = 14

    x = jax.random.normal(k_x, (batch, input_features), dtype=jnp.float32)
    params = init_params(k_p, input_features, output_features, hidden_units)

    # One-time fold of the activation-free 3-layer MLP into a single affine map.
    w_folded, b_folded = prepare_params(params)

    # Force the Pallas path so the kernel is exercised (the auto-dispatcher
    # routes a batch of 8 to the XLA fast path, which is the right call in
    # production but would skip the kernel here).
    out = blob_model_forward(x, w_folded, b_folded, use_pallas=True)
    out = jax.block_until_ready(out)

    # Also exercise the auto-dispatch (small-problem fast) path once.
    out_fast = jax.block_until_ready(blob_model_forward(x, w_folded, b_folded))

    # Reference: the original un-fused 3-layer forward in plain JAX.
    ref = x
    for wn, bn in (("w1", "b1"), ("w2", "b2"), ("w3", "b3")):
        ref = ref @ params[wn].T + params[bn]

    assert out.shape == (batch, output_features)
    assert jnp.allclose(out, ref, atol=1e-5, rtol=1e-5), (
        f"pallas path max abs err = {jnp.max(jnp.abs(out - ref))}")
    assert jnp.allclose(out_fast, ref, atol=1e-5, rtol=1e-5), (
        f"fast path max abs err = {jnp.max(jnp.abs(out_fast - ref))}")

    print("KERNEL_OK")
</pallas_src>

<mosaic_0001>
module attributes {stable_mosaic.version = 11 : i64} {
  func.func @affine_t_kernel(%arg0: i32, %arg1: memref<4x8xf32, #tpu.memory_space<vmem>>, %arg2: memref<3x4xf32, #tpu.memory_space<vmem>>, %arg3: memref<3x1xf32, #tpu.memory_space<vmem>>, %arg4: memref<3x8xf32, #tpu.memory_space<vmem>>) attributes {dimension_semantics = [#tpu.dimension_semantics<parallel>], iteration_bounds = array<i64: 1>, scalar_prefetch = 0 : i64, scratch_operands = 0 : i64, tpu.core_type = #tpu.core_type<tc>, window_params = [{transform_indices = @transform_0, window_bounds = array<i64: 4, 8>}, {pipeline_mode = #tpu.pipeline_mode<synchronous>, transform_indices = @transform_1, window_bounds = array<i64: 3, 4>}, {pipeline_mode = #tpu.pipeline_mode<synchronous>, transform_indices = @transform_2, window_bounds = array<i64: 3, 1>}, {transform_indices = @transform_3, window_bounds = array<i64: 3, 8>}]} {
    %c0 = arith.constant 0 : index
    %c0_0 = arith.constant 0 : index
    %0 = vector.load %arg1[%c0, %c0_0] : memref<4x8xf32, #tpu.memory_space<vmem>>, vector<4x8xf32>
    %c0_1 = arith.constant 0 : index
    %c0_2 = arith.constant 0 : index
    %1 = vector.load %arg2[%c0_1, %c0_2] : memref<3x4xf32, #tpu.memory_space<vmem>>, vector<3x4xf32>
    %c0_3 = arith.constant 0 : index
    %c0_4 = arith.constant 0 : index
    %2 = vector.load %arg3[%c0_3, %c0_4] : memref<3x1xf32, #tpu.memory_space<vmem>>, vector<3x1xf32>
    %3 = vector.extract_strided_slice %1 {offsets = [0, 0], sizes = [3, 1], strides = [1, 1]} : vector<3x4xf32> to vector<3x1xf32>
    %4 = vector.extract_strided_slice %0 {offsets = [0, 0], sizes = [1, 8], strides = [1, 1]} : vector<4x8xf32> to vector<1x8xf32>
    %5 = vector.broadcast %3 : vector<3x1xf32> to vector<3x8xf32>
    %6 = vector.broadcast %4 : vector<1x8xf32> to vector<3x8xf32>
    %7 = arith.mulf %5, %6 : vector<3x8xf32>
    %8 = vector.extract_strided_slice %1 {offsets = [0, 1], sizes = [3, 1], strides = [1, 1]} : vector<3x4xf32> to vector<3x1xf32>
    %9 = vector.extract_strided_slice %0 {offsets = [1, 0], sizes = [1, 8], strides = [1, 1]} : vector<4x8xf32> to vector<1x8xf32>
    %10 = vector.broadcast %8 : vector<3x1xf32> to vector<3x8xf32>
    %11 = vector.broadcast %9 : vector<1x8xf32> to vector<3x8xf32>
    %12 = arith.mulf %10, %11 : vector<3x8xf32>
    %13 = arith.addf %7, %12 : vector<3x8xf32>
    %14 = vector.extract_strided_slice %1 {offsets = [0, 2], sizes = [3, 1], strides = [1, 1]} : vector<3x4xf32> to vector<3x1xf32>
    %15 = vector.extract_strided_slice %0 {offsets = [2, 0], sizes = [1, 8], strides = [1, 1]} : vector<4x8xf32> to vector<1x8xf32>
    %16 = vector.broadcast %14 : vector<3x1xf32> to vector<3x8xf32>
    %17 = vector.broadcast %15 : vector<1x8xf32> to vector<3x8xf32>
    %18 = arith.mulf %16, %17 : vector<3x8xf32>
    %19 = arith.addf %13, %18 : vector<3x8xf32>
    %20 = vector.extract_strided_slice %1 {offsets = [0, 3], sizes = [3, 1], strides = [1, 1]} : vector<3x4xf32> to vector<3x1xf32>
    %21 = vector.extract_strided_slice %0 {offsets = [3, 0], sizes = [1, 8], strides = [1, 1]} : vector<4x8xf32> to vector<1x8xf32>
    %22 = vector.broadcast %20 : vector<3x1xf32> to vector<3x8xf32>
    %23 = vector.broadcast %21 : vector<1x8xf32> to vector<3x8xf32>
    %24 = arith.mulf %22, %23 : vector<3x8xf32>
    %25 = arith.addf %19, %24 : vector<3x8xf32>
    %26 = vector.broadcast %2 : vector<3x1xf32> to vector<3x8xf32>
    %27 = arith.addf %25, %26 : vector<3x8xf32>
    %c0_5 = arith.constant 0 : index
    %c0_6 = arith.constant 0 : index
    %28 = vector.load %arg4[%c0_5, %c0_6] : memref<3x8xf32, #tpu.memory_space<vmem>>, vector<3x8xf32>
    tpu.vector_store %arg4[%c0_5, %c0_6], %27 {strides = array<i32>} : memref<3x8xf32, #tpu.memory_space<vmem>>, vector<3x8xf32>,
    return
  }
  func.func @transform_0(%arg0: i32) -> (i32, i32) {
    %c0_i32 = arith.constant 0 : i32
    %c0_i32_0 = arith.constant 0 : i32
    return %c0_i32, %arg0 : i32, i32
  }
  func.func @transform_1(%arg0: i32) -> (i32, i32) {
    %c0_i32 = arith.constant 0 : i32
    %c0_i32_0 = arith.constant 0 : i32
    %c0_i32_1 = arith.constant 0 : i32
    return %c0_i32, %c0_i32_0 : i32, i32
  }
  func.func @transform_2(%arg0: i32) -> (i32, i32) {
    %c0_i32 = arith.constant 0 : i32
    %c0_i32_0 = arith.constant 0 : i32
    %c0_i32_1 = arith.constant 0 : i32
    return %c0_i32, %c0_i32_0 : i32, i32
  }
  func.func @transform_3(%arg0: i32) -> (i32, i32) {
    %c0_i32 = arith.constant 0 : i32
    %c0_i32_0 = arith.constant 0 : i32
    return %c0_i32, %arg0 : i32, i32
  }
}

</mosaic_0001>

<llo_original>
// kernel: blob_model_forward.1
$region0: #{blob_model_forward.1}
  #allocation0 [shape = 'u32[]', space=smem, size = 0x4, offset = 0x4, fixed_abs, tag = 'smem constant byte address 0x4 - core index']
  #allocation1 [shape = 'u32[144,128]{1,0:T(1,128)}', space=vmem, size = 0x12000, scoped, tag = 'internal scratch']
  %s0 = inlined_call_operand.vmem [shape: f32[4,8], index: 0, kind: input, shape index: {}]
  %s1 = inlined_call_operand.vmem [shape: f32[3,4], index: 1, kind: input, shape index: {}]
  %s2 = inlined_call_operand.vmem [shape: f32[3,1], index: 2, kind: input, shape index: {}]
  %s3 = inlined_call_operand.hbm [shape: f32[3,8], index: 3, kind: output, shape index: {}]
  %s4 = sld [smem:[#allocation0]]
  $region22: #{blob_model_forward.1} parent=0
    _
  %s6 = ssub.s32 1, %s4
  %s7 = scalar_select 0, %s6, %s4
  $region1: #{blob_model_forward.1} parent=0
    #allocation2 [shape = 'u8[2048]{0}', space=vmem, size = 0x800, scoped, tag = 'output window, operand 0, single buffered']
    #allocation3 [shape = 's32[1]{0}', space=sflag, size = 0x4, scoped, tag = 'scoped memory for blob_model_forward.1']
    %8 = vsyncpa [#allocation3], 0
    // Predicated region
    $region2: #{blob_model_forward.1} parent=1 // pred_check
      _
    $region3: #{blob_model_forward.1} parent=1 // pred_check_branch
      %10 = sbr.rel (0) target = $region5
    $region4: #{blob_model_forward.1} parent=1 // pred_region
      _
    $region5: #{blob_model_forward.1} parent=1 // pred_fallthru
      _
    // Predicated region
    $region6: #{blob_model_forward.1} parent=1 // pred_check
      _
    $region7: #{blob_model_forward.1} parent=1 // pred_check_branch
      %12 = sbr.rel (0) target = $region9
    $region8: #{blob_model_forward.1} parent=1 // pred_region
      _
    $region9: #{blob_model_forward.1} parent=1 // pred_fallthru
      _
    // Predicated region
    $region10: #{blob_model_forward.1} parent=1 // pred_check
      _
    $region11: #{blob_model_forward.1} parent=1 // pred_check_branch
      %14 = sbr.rel (0) target = $region13
    $region12: #{blob_model_forward.1} parent=1 // pred_region
      _
    $region13: #{blob_model_forward.1} parent=1 // pred_fallthru
      _
    %v15 = vld [vmem:[%s0] sm:$0xf]
    %v16 = vld [vmem:[%s1] sm:$0x7]
    %v17 = vld [vmem:[%s2] sm:$0x7]
    %19 = vset.pattern.permute.xlu0 0
    %20 = vperm.xlu0 %19, %v16
    %v21 = vpop.permute.xlu0 %20
    %v23 = vlaneseq
    %v24 = vshrl.u32 %v23, 7
    %v25 = vsub.s32 0, %v24
    %v26 = vrot.slane %v15, %v25
    %v27 = vmul.f32 %v21, %v26
    %28 = vset.pattern.permute.xlu0 1
    %29 = vperm.xlu0 %28, %v16
    %v30 = vpop.permute.xlu0 %29
    %v32 = vlaneseq
    %v33 = vshrl.u32 %v32, 7
    %v34 = vsub.s32 1, %v33
    %v35 = vrot.slane %v15, %v34
    %v36 = vmul.f32 %v30, %v35
    %v37 = vadd.f32 %v27, %v36
    %38 = vset.pattern.permute.xlu0 2
    %39 = vperm.xlu0 %38, %v16
    %v40 = vpop.permute.xlu0 %39
    %v42 = vlaneseq
    %v43 = vshrl.u32 %v42, 7
    %v44 = vsub.s32 2, %v43
    %v45 = vrot.slane %v15, %v44
    %v46 = vmul.f32 %v40, %v45
    %v47 = vadd.f32 %v37, %v46
    %48 = vset.pattern.permute.xlu0 3
    %49 = vperm.xlu0 %48, %v16
    %v50 = vpop.permute.xlu0 %49
    %v52 = vlaneseq
    %v53 = vshrl.u32 %v52, 7
    %v54 = vsub.s32 3, %v53
    %v55 = vrot.slane %v15, %v54
    %v56 = vmul.f32 %v50, %v55
    %v57 = vadd.f32 %v47, %v56
    %59 = vset.pattern.permute.xlu0 0
    %60 = vperm.xlu0 %59, %v17
    %v61 = vpop.permute.xlu0 %60
    %v63 = vadd.f32 %v57, %v61
    %vm64 = vcmask 59392
    %65 = vst.msk [vmem:[#allocation2] sm:$0x7] %vm64, %v63
    // Predicated region
    $region14: #{blob_model_forward.1} parent=1 // pred_check
      _
    $region15: #{blob_model_forward.1} parent=1 // pred_check_branch
      %67 = sbr.rel (0) target = $region17
    $region16: #{blob_model_forward.1} parent=1 // pred_region
      %s69 = ssub.s32 64, 64
      %70 = vsyncadd [#allocation3], %s69
      %s72 = sshll.u32 [#allocation2], 4
      %s73 = int_to_ptr.vmem [resolvable:$true] %s72
      %75 = dma.vmem_to_hbm [thread:$0]  %s73, 64, %s3, [#allocation3]
    $region17: #{blob_model_forward.1} parent=1 // pred_fallthru
      _
    // Predicated region
    $region18: #{blob_model_forward.1} parent=1 // pred_check
      _
    $region19: #{blob_model_forward.1} parent=1 // pred_check_branch
      %77 = sbr.rel (0) target = $region21
    $region20: #{blob_model_forward.1} parent=1 // pred_region
      %78 = dma.done [#allocation3], 64
    $region21: #{blob_model_forward.1} parent=1 // pred_fallthru
      _
    %79 = vsyncpa [#allocation3], 1

</llo_original>
